<compile_context>
chip_gen: v7x
topology: tpu7x:2x2x1
jax: 0.10.0
libtpu: 0.0.40
codegen_flags: <defaults>
</compile_context>

<pallas_src>
import functools
import math

import jax
import jax.numpy as jnp
from jax.experimental import pallas as pl
from jax.experimental.pallas import tpu as pltpu


def _round_up(x: int, m: int) -> int:
    return (x + m - 1) // m * m


def _vmem_capacity_bytes() -> int:
    """Generation-aware VMEM capacity; conservative fallback if unavailable."""
    try:
        return int(pltpu.get_tpu_info().vmem_capacity_bytes)
    except Exception:
        return 64 * 1024 * 1024  # v7x per-TC size: safe lower bound everywhere


def _layernorm_kernel(x_ref, gain_ref, bias_ref, o_ref, *, epsilon: float):
    """One (tile_rows, D) slab: LayerNorm over the last (lane) axis."""
    x = x_ref[...]
    # Reductions in f32 for accuracy; skip the cast when already f32 so no
    # redundant per-step vreg work is emitted.
    xf = x if x.dtype == jnp.float32 else x.astype(jnp.float32)
    d = xf.shape[-1]

    mean = jnp.mean(xf, axis=-1, keepdims=True)
    diff = xf - mean
    # torch.std default is unbiased (Bessel's correction, divide by D-1).
    var = jnp.sum(diff * diff, axis=-1, keepdims=True) * (1.0 / (d - 1))
    std = jnp.sqrt(var)

    # Exact reciprocal on the (tile_rows, 1) reduced column + VPU multiply
    # instead of a full-width broadcast divide.  approx=True caused the
    # tolerance failure; exact costs ~nothing on the tiny reduced column.
    inv = pl.reciprocal(std + epsilon, approx=False)

    g = gain_ref[...]
    b = bias_ref[...]
    g = g if g.dtype == jnp.float32 else g.astype(jnp.float32)
    b = b if b.dtype == jnp.float32 else b.astype(jnp.float32)

    out = g * (diff * inv) + b
    o_ref[...] = out.astype(o_ref.dtype)


def layer_norm(x: jax.Array, gain: jax.Array, bias: jax.Array,
               epsilon: float = 1e-12, tile_rows: int = 1024) -> jax.Array:
    """LayerNorm over the last axis of x. x: (..., D); gain/bias: (D,)."""
    orig_shape = x.shape
    d = orig_shape[-1]
    n_rows = math.prod(orig_shape[:-1]) if len(orig_shape) > 1 else 1

    x2 = x.reshape(n_rows, d)
    gain2 = gain.reshape(1, d)
    bias2 = bias.reshape(1, d)

    # Sublane alignment: f32 packs 8 rows per vreg, bf16 packs 16.
    sublane = 16 if x.dtype == jnp.bfloat16 else 8
    in_bytes = jnp.dtype(x.dtype).itemsize

    # VMEM footprint per tile row:
    #   double-buffered input block + double-buffered output block
    #   + ~3 f32 intermediates inside the kernel (xf, diff, out).
    per_row_bytes = d * (2 * in_bytes + 2 * in_bytes + 3 * 4)

    # Budget tile size against ~35% of this generation's VMEM capacity
    # (128 MiB v5e/v6e -> big blocks; 64 MiB v7x -> still comfortable).
    cap = _vmem_capacity_bytes()
    budget = int(cap * 0.35)
    max_tile_rows = max(sublane, (budget // per_row_bytes) // sublane * sublane)

    tile_rows = min(tile_rows, max_tile_rows)
    tile_rows = max(sublane, tile_rows // sublane * sublane)
    # Never tile larger than the problem itself.
    tile_rows = min(tile_rows, _round_up(n_rows, sublane))

    # Ragged row counts: rely on Pallas masking the tail block of a
    # non-divisible grid.  Garbage tail-row reads are harmless (per-row
    # reduction); tail-block out-of-bounds writes are dropped.
    n_tiles = pl.cdiv(n_rows, tile_rows)

    # Scoped-VMEM limit: double-buffered in/out blocks + f32 working set
    # + resident gain/bias, with slack; clamped under this chip's capacity.
    needed = (2 * 2 * tile_rows * d * in_bytes      # in + out, double-buffered
              + 3 * tile_rows * d * 4               # f32 intermediates
              + 4 * d * 4)                          # gain/bias (f32-ish)
    vmem_limit = int(min(cap * 3 // 4, max(needed + (4 << 20), 16 << 20)))

    kernel = functools.partial(_layernorm_kernel, epsilon=epsilon)

    out2 = pl.pallas_call(
        kernel,
        out_shape=jax.ShapeDtypeStruct((n_rows, d), x.dtype),
        grid_spec=pltpu.PrefetchScalarGridSpec(
            num_scalar_prefetch=0,
            grid=(n_tiles,),
            in_specs=[
                pl.BlockSpec((tile_rows, d), lambda i: (i, 0)),  # x rows tile
                pl.BlockSpec((1, d), lambda i: (0, 0)),          # gain (resident)
                pl.BlockSpec((1, d), lambda i: (0, 0)),          # bias (resident)
            ],
            out_specs=pl.BlockSpec((tile_rows, d), lambda i: (i, 0)),
        ),
        compiler_params=pltpu.CompilerParams(
            dimension_semantics=("parallel",),   # shards rows across v7x's 2 TCs
            vmem_limit_bytes=vmem_limit,
        ),
    )(x2, gain2, bias2)

    return out2.reshape(orig_shape)


if __name__ == "__main__":
    # Small shapes consistent with the module: batch=2, seq=8, embedding_dim=512
    # (the module's default embedding_dim).
    batch, seq, embed = 2, 8, 512
    epsilon = 1e-12

    key = jax.random.PRNGKey(0)
    x = jax.random.normal(key, (batch, seq, embed), dtype=jnp.float32)

    # Deterministic parameter init matching nn.Parameter(torch.ones/zeros(D)).
    gain = jnp.ones((embed,), dtype=jnp.float32)
    bias = jnp.zeros((embed,), dtype=jnp.float32)

    out = layer_norm(x, gain, bias, epsilon=epsilon)
    out = jax.block_until_ready(out)

    # Reference check in plain JAX (same unbiased-std, eps-outside-sqrt
    # semantics as the PyTorch module).
    mean = jnp.mean(x, axis=-1, keepdims=True)
    std = jnp.sqrt(jnp.sum((x - mean) ** 2, axis=-1, keepdims=True) / (embed - 1))
    ref = gain * (x - mean) / (std + epsilon) + bias
    assert jnp.allclose(out, ref, atol=1e-4, rtol=1e-4), "mismatch vs reference"

    print("KERNEL_OK")
</pallas_src>

<mosaic_0001>
module attributes {stable_mosaic.version = 11 : i64} {
  func.func @_layernorm_kernel(%arg0: i32, %arg1: memref<16x512xf32, #tpu.memory_space<vmem>>, %arg2: memref<1x512xf32, #tpu.memory_space<vmem>>, %arg3: memref<1x512xf32, #tpu.memory_space<vmem>>, %arg4: memref<16x512xf32, #tpu.memory_space<vmem>>) attributes {dimension_semantics = [#tpu.dimension_semantics<parallel>], iteration_bounds = array<i64: 1>, scalar_prefetch = 0 : i64, scratch_operands = 0 : i64, tpu.core_type = #tpu.core_type<tc>, window_params = [{transform_indices = @transform_0, window_bounds = array<i64: 16, 512>}, {pipeline_mode = #tpu.pipeline_mode<synchronous>, transform_indices = @transform_1, window_bounds = array<i64: 1, 512>}, {pipeline_mode = #tpu.pipeline_mode<synchronous>, transform_indices = @transform_2, window_bounds = array<i64: 1, 512>}, {transform_indices = @transform_3, window_bounds = array<i64: 16, 512>}]} {
    %c0 = arith.constant 0 : index
    %c0_0 = arith.constant 0 : index
    %0 = vector.load %arg1[%c0, %c0_0] : memref<16x512xf32, #tpu.memory_space<vmem>>, vector<16x512xf32>
    %cst = arith.constant dense<0.000000e+00> : vector<16xf32>
    %1 = vector.multi_reduction <add>, %0, %cst [1] : vector<16x512xf32> to vector<16xf32>
    %2 = vector.shape_cast %1 : vector<16xf32> to vector<16x1xf32>
    %cst_1 = arith.constant 5.120000e+02 : f32
    %3 = vector.broadcast %cst_1 : f32 to vector<16x1xf32>
    %4 = arith.divf %2, %3 : vector<16x1xf32>
    %5 = vector.broadcast %4 : vector<16x1xf32> to vector<16x512xf32>
    %6 = arith.subf %0, %5 : vector<16x512xf32>
    %7 = arith.mulf %6, %6 : vector<16x512xf32>
    %cst_2 = arith.constant dense<0.000000e+00> : vector<16xf32>
    %8 = vector.multi_reduction <add>, %7, %cst_2 [1] : vector<16x512xf32> to vector<16xf32>
    %9 = vector.shape_cast %8 : vector<16xf32> to vector<16x1xf32>
    %cst_3 = arith.constant 0.00195694715 : f32
    %10 = vector.broadcast %cst_3 : f32 to vector<16x1xf32>
    %11 = arith.mulf %9, %10 : vector<16x1xf32>
    %12 = math.sqrt %11 : vector<16x1xf32>
    %cst_4 = arith.constant 9.99999996E-13 : f32
    %13 = vector.broadcast %cst_4 : f32 to vector<16x1xf32>
    %14 = arith.addf %12, %13 : vector<16x1xf32>
    %15 = tpu.reciprocal %14 : vector<16x1xf32> -> vector<16x1xf32>
    %c0_5 = arith.constant 0 : index
    %c0_6 = arith.constant 0 : index
    %16 = vector.load %arg2[%c0_5, %c0_6] : memref<1x512xf32, #tpu.memory_space<vmem>>, vector<1x512xf32>
    %c0_7 = arith.constant 0 : index
    %c0_8 = arith.constant 0 : index
    %17 = vector.load %arg3[%c0_7, %c0_8] : memref<1x512xf32, #tpu.memory_space<vmem>>, vector<1x512xf32>
    %18 = vector.broadcast %15 : vector<16x1xf32> to vector<16x512xf32>
    %19 = arith.mulf %6, %18 : vector<16x512xf32>
    %20 = vector.broadcast %16 : vector<1x512xf32> to vector<16x512xf32>
    %21 = arith.mulf %20, %19 : vector<16x512xf32>
    %22 = vector.broadcast %17 : vector<1x512xf32> to vector<16x512xf32>
    %23 = arith.addf %21, %22 : vector<16x512xf32>
    %c0_9 = arith.constant 0 : index
    %c0_10 = arith.constant 0 : index
    %24 = vector.load %arg4[%c0_9, %c0_10] : memref<16x512xf32, #tpu.memory_space<vmem>>, vector<16x512xf32>
    tpu.vector_store %arg4[%c0_9, %c0_10], %23 {strides = array<i32>} : memref<16x512xf32, #tpu.memory_space<vmem>>, vector<16x512xf32>,
    return
  }
  func.func @transform_0(%arg0: i32) -> (i32, i32) {
    %c0_i32 = arith.constant 0 : i32
    %c0_i32_0 = arith.constant 0 : i32
    return %arg0, %c0_i32 : i32, i32
  }
  func.func @transform_1(%arg0: i32) -> (i32, i32) {
    %c0_i32 = arith.constant 0 : i32
    %c0_i32_0 = arith.constant 0 : i32
    %c0_i32_1 = arith.constant 0 : i32
    return %c0_i32, %c0_i32_0 : i32, i32
  }
  func.func @transform_2(%arg0: i32) -> (i32, i32) {
    %c0_i32 = arith.constant 0 : i32
    %c0_i32_0 = arith.constant 0 : i32
    %c0_i32_1 = arith.constant 0 : i32
    return %c0_i32, %c0_i32_0 : i32, i32
  }
  func.func @transform_3(%arg0: i32) -> (i32, i32) {
    %c0_i32 = arith.constant 0 : i32
    %c0_i32_0 = arith.constant 0 : i32
    return %arg0, %c0_i32 : i32, i32
  }
}

</mosaic_0001>

<llo_original>
// kernel: tpu_custom_call.1
$region0: #{tpu_custom_call.1}
  #allocation0 [shape = 'u32[]', space=smem, size = 0x4, offset = 0x4, fixed_abs, tag = 'smem constant byte address 0x4 - core index']
  #allocation1 [shape = 'u32[144,128]{1,0:T(1,128)}', space=vmem, size = 0x12000, scoped, tag = 'internal scratch']
  %s0 = inlined_call_operand.hbm [shape: f32[16,512], index: 0, kind: input, shape index: {}]
  %s1 = inlined_call_operand.hbm [shape: f32[1,512], index: 1, kind: input, shape index: {}]
  %s2 = inlined_call_operand.vmem [shape: f32[1,512], index: 2, kind: input, shape index: {}]
  %s3 = inlined_call_operand.hbm [shape: f32[16,512], index: 3, kind: output, shape index: {}]
  %s4 = sld [smem:[#allocation0]]
  $region30: #{tpu_custom_call.1} parent=0
    _
  %s6 = ssub.s32 1, %s4
  %s7 = scalar_select 0, %s6, %s4
  $region1: #{tpu_custom_call.1} parent=0
    #allocation2 [shape = 'u8[32768]{0}', space=vmem, size = 0x8000, scoped, tag = 'input window, operand 0, single buffered']
    #allocation3 [shape = 's32[1]{0}', space=sflag, size = 0x4, scoped, tag = 'scoped memory for tpu_custom_call.1']
    #allocation4 [shape = 's32[1]{0}', space=sflag, size = 0x4, scoped, tag = 'scoped memory for tpu_custom_call.1']
    #allocation5 [shape = 'u8[2048]{0}', space=vmem, size = 0x800, scoped, tag = 'input window, operand 1, single buffered']
    #allocation6 [shape = 's32[1]{0}', space=sflag, size = 0x4, scoped, tag = 'scoped memory for tpu_custom_call.1']
    #allocation7 [shape = 'u8[32768]{0}', space=vmem, size = 0x8000, scoped, tag = 'output window, operand 0, single buffered']
    %8 = vsyncpa [#allocation3], 0
    %9 = vsyncpa [#allocation6], 0
    %10 = vsyncpa [#allocation4], 0
    // Predicated region
    $region2: #{tpu_custom_call.1} parent=1 // pred_check
      _
    $region3: #{tpu_custom_call.1} parent=1 // pred_check_branch
      %12 = sbr.rel (0) target = $region5
    $region4: #{tpu_custom_call.1} parent=1 // pred_region
      %s14 = ssub.s32 1024, 1024
      %15 = vsyncadd [#allocation3], %s14
      %s16 = sshll.u32 [#allocation2], 4
      %s17 = int_to_ptr.vmem [resolvable:$true] %s16
      %22 = dma.hbm_to_vmem [thread:$0]  %s0, 1024, %s17, [#allocation3], 512, 512, 32
    $region5: #{tpu_custom_call.1} parent=1 // pred_fallthru
      _
    // Predicated region
    $region6: #{tpu_custom_call.1} parent=1 // pred_check
      _
    $region7: #{tpu_custom_call.1} parent=1 // pred_check_branch
      %24 = sbr.rel (0) target = $region9
    $region8: #{tpu_custom_call.1} parent=1 // pred_region
      %s26 = ssub.s32 64, 64
      %27 = vsyncadd [#allocation6], %s26
      %s29 = sshll.u32 [#allocation5], 4
      %s30 = int_to_ptr.vmem [resolvable:$true] %s29
      %32 = dma.hbm_to_vmem [thread:$0]  %s1, 64, %s30, [#allocation6]
    $region9: #{tpu_custom_call.1} parent=1 // pred_fallthru
      _
    // Predicated region
    $region10: #{tpu_custom_call.1} parent=1 // pred_check
      _
    $region11: #{tpu_custom_call.1} parent=1 // pred_check_branch
      %34 = sbr.rel (0) target = $region13
    $region12: #{tpu_custom_call.1} parent=1 // pred_region
      _
    $region13: #{tpu_custom_call.1} parent=1 // pred_fallthru
      _
    // Predicated region
    $region14: #{tpu_custom_call.1} parent=1 // pred_check
      _
    $region15: #{tpu_custom_call.1} parent=1 // pred_check_branch
      %36 = sbr.rel (0) target = $region17
    $region16: #{tpu_custom_call.1} parent=1 // pred_region
      %37 = dma.done [#allocation3], 1024
    $region17: #{tpu_custom_call.1} parent=1 // pred_fallthru
      _
    // Predicated region
    $region18: #{tpu_custom_call.1} parent=1 // pred_check
      _
    $region19: #{tpu_custom_call.1} parent=1 // pred_check_branch
      %39 = sbr.rel (0) target = $region21
    $region20: #{tpu_custom_call.1} parent=1 // pred_region
      %40 = dma.done [#allocation6], 64
    $region21: #{tpu_custom_call.1} parent=1 // pred_fallthru
      _
    %v41 = vld [vmem:[#allocation2] sm:$0xff]
    %v42 = vld [vmem:[#allocation2 + $0x8] sm:$0xff]
    %v43 = vld [vmem:[#allocation2 + $0x10] sm:$0xff]
    %v44 = vld [vmem:[#allocation2 + $0x18] sm:$0xff]
    %v45 = vld [vmem:[#allocation2 + $0x20] sm:$0xff]
    %v46 = vld [vmem:[#allocation2 + $0x28] sm:$0xff]
    %v47 = vld [vmem:[#allocation2 + $0x30] sm:$0xff]
    %v48 = vld [vmem:[#allocation2 + $0x38] sm:$0xff]
    %v49 = vadd.f32 %v41, %v42
    %v50 = vadd.f32 %v49, %v43
    %v51 = vadd.f32 %v50, %v44
    %52 = vadd.xlane.f32.xlu0 %v51
    %v53 = vpop.xlane.xlu0 %52
    %v54 = vadd.f32 %v45, %v46
    %v55 = vadd.f32 %v54, %v47
    %v56 = vadd.f32 %v55, %v48
    %57 = vadd.xlane.f32.xlu0 %v56
    %v58 = vpop.xlane.xlu0 %57
    %v59 = vrcp.pop 512.0
    %v60 = vmul.f32 %v53, %v59
    %v61 = vmul.f32 %v58, %v59
    %v62 = vsub.f32 %v41, %v60
    %v63 = vsub.f32 %v42, %v60
    %v64 = vsub.f32 %v43, %v60
    %v65 = vsub.f32 %v44, %v60
    %v66 = vsub.f32 %v45, %v61
    %v67 = vsub.f32 %v46, %v61
    %v68 = vsub.f32 %v47, %v61
    %v69 = vsub.f32 %v48, %v61
    %v70 = vmul.f32 %v62, %v62
    %v71 = vmul.f32 %v63, %v63
    %v72 = vmul.f32 %v64, %v64
    %v73 = vmul.f32 %v65, %v65
    %v74 = vmul.f32 %v66, %v66
    %v75 = vmul.f32 %v67, %v67
    %v76 = vmul.f32 %v68, %v68
    %v77 = vmul.f32 %v69, %v69
    %v78 = vadd.f32 %v70, %v71
    %v79 = vadd.f32 %v78, %v72
    %v80 = vadd.f32 %v79, %v73
    %81 = vadd.xlane.f32.xlu0 %v80
    %v82 = vpop.xlane.xlu0 %81
    %v83 = vadd.f32 %v74, %v75
    %v84 = vadd.f32 %v83, %v76
    %v85 = vadd.f32 %v84, %v77
    %86 = vadd.xlane.f32.xlu0 %v85
    %v87 = vpop.xlane.xlu0 %86
    %v88 = vmul.f32 %v82, 0.0019569471
    %v89 = vmul.f32 %v87, 0.0019569471
    %v90 = vrsqrt.pop %v88
    %v91 = vmul.f32 %v88, %v90
    %vm92 = vcmp.eq.f32.partialorder %v88, inf
    %v93 = vsel %vm92, %v88, %v91
    %vm94 = vcmp.eq.f32.partialorder %v88, 0.0
    %v95 = vand.u32 %v88, 2147483648
    %v96 = vsel %vm94, %v95, %v93
    %v97 = vrsqrt.pop %v89
    %v98 = vmul.f32 %v89, %v97
    %vm99 = vcmp.eq.f32.partialorder %v89, inf
    %v100 = vsel %vm99, %v89, %v98
    %vm101 = vcmp.eq.f32.partialorder %v89, 0.0
    %v102 = vand.u32 %v89, 2147483648
    %v103 = vsel %vm101, %v102, %v100
    %v104 = vadd.f32 %v96, 1e-12
    %v105 = vadd.f32 %v103, 1e-12
    %v106 = vrcp.pop %v104
    %v107 = vrcp.pop %v105
    %v108 = vld [vmem:[#allocation5] sm:$0xf]
    %v109 = vld [vmem:[%s2] sm:$0xf]
    %v110 = vmul.f32 %v62, %v106
    %v111 = vmul.f32 %v63, %v106
    %v112 = vmul.f32 %v64, %v106
    %v113 = vmul.f32 %v65, %v106
    %v114 = vmul.f32 %v66, %v107
    %v115 = vmul.f32 %v67, %v107
    %v116 = vmul.f32 %v68, %v107
    %v117 = vmul.f32 %v69, %v107
    %v119 = vlaneseq
    %v120 = vshrl.u32 %v119, 7
    %v121 = vsub.s32 0, %v120
    %v122 = vrot.slane %v108, %v121
    %v123 = vlaneseq
    %v124 = vshrl.u32 %v123, 7
    %v125 = vsub.s32 1, %v124
    %v126 = vrot.slane %v108, %v125
    %v127 = vlaneseq
    %v128 = vshrl.u32 %v127, 7
    %v129 = vsub.s32 2, %v128
    %v130 = vrot.slane %v108, %v129
    %v131 = vlaneseq
    %v132 = vshrl.u32 %v131, 7
    %v133 = vsub.s32 3, %v132
    %v134 = vrot.slane %v108, %v133
    %v139 = vmul.f32 %v122, %v110
    %v140 = vmul.f32 %v126, %v111
    %v141 = vmul.f32 %v130, %v112
    %v142 = vmul.f32 %v134, %v113
    %v143 = vmul.f32 %v122, %v114
    %v144 = vmul.f32 %v126, %v115
    %v145 = vmul.f32 %v130, %v116
    %v146 = vmul.f32 %v134, %v117
    %v148 = vlaneseq
    %v149 = vshrl.u32 %v148, 7
    %v150 = vsub.s32 0, %v149
    %v151 = vrot.slane %v109, %v150
    %v152 = vlaneseq
    %v153 = vshrl.u32 %v152, 7
    %v154 = vsub.s32 1, %v153
    %v155 = vrot.slane %v109, %v154
    %v156 = vlaneseq
    %v157 = vshrl.u32 %v156, 7
    %v158 = vsub.s32 2, %v157
    %v159 = vrot.slane %v109, %v158
    %v160 = vlaneseq
    %v161 = vshrl.u32 %v160, 7
    %v162 = vsub.s32 3, %v161
    %v163 = vrot.slane %v109, %v162
    %v168 = vadd.f32 %v139, %v151
    %v169 = vadd.f32 %v140, %v155
    %v170 = vadd.f32 %v141, %v159
    %v171 = vadd.f32 %v142, %v163
    %v172 = vadd.f32 %v143, %v151
    %v173 = vadd.f32 %v144, %v155
    %v174 = vadd.f32 %v145, %v159
    %v175 = vadd.f32 %v146, %v163
    %176 = vst [vmem:[#allocation7] sm:$0xff] %v168
    %177 = vst [vmem:[#allocation7 + $0x8] sm:$0xff] %v169
    %178 = vst [vmem:[#allocation7 + $0x10] sm:$0xff] %v170
    %179 = vst [vmem:[#allocation7 + $0x18] sm:$0xff] %v171
    %180 = vst [vmem:[#allocation7 + $0x20] sm:$0xff] %v172
    %181 = vst [vmem:[#allocation7 + $0x28] sm:$0xff] %v173
    %182 = vst [vmem:[#allocation7 + $0x30] sm:$0xff] %v174
    %183 = vst [vmem:[#allocation7 + $0x38] sm:$0xff] %v175
    // Predicated region
    $region22: #{tpu_custom_call.1} parent=1 // pred_check
      _
    $region23: #{tpu_custom_call.1} parent=1 // pred_check_branch
      %185 = sbr.rel (0) target = $region25
    $region24: #{tpu_custom_call.1} parent=1 // pred_region
      %s187 = ssub.s32 1024, 1024
      %188 = vsyncadd [#allocation4], %s187
      %s189 = sshll.u32 [#allocation7], 4
      %s190 = int_to_ptr.vmem [resolvable:$true] %s189
      %195 = dma.vmem_to_hbm [thread:$0]  %s190, 1024, %s3, [#allocation4], 512, 512, 32
    $region25: #{tpu_custom_call.1} parent=1 // pred_fallthru
      _
    // Predicated region
    $region26: #{tpu_custom_call.1} parent=1 // pred_check
      _
    $region27: #{tpu_custom_call.1} parent=1 // pred_check_branch
      %197 = sbr.rel (0) target = $region29
    $region28: #{tpu_custom_call.1} parent=1 // pred_region
      %198 = dma.done [#allocation4], 1024
    $region29: #{tpu_custom_call.1} parent=1 // pred_fallthru
      _
    %199 = vsyncpa [#allocation3], 1
    %200 = vsyncpa [#allocation6], 1
    %201 = vsyncpa [#allocation4], 1

</llo_original>
